<compile_context>
chip_gen: v7x
topology: tpu7x:2x2x1
jax: 0.10.0
libtpu: 0.0.40
codegen_flags: <defaults>
</compile_context>

<pallas_src>
import jax
import jax.numpy as jnp
from jax.experimental import pallas as pl
from jax.experimental.pallas import tpu as pltpu


def _round_up(x, m):
    return ((x + m - 1) // m) * m


def _swiglu_kernel(x_ref, wg_ref, wh_ref, wo_ref, o_ref, *scratch):
    """One (tm x th) step of SwiGLU along the streamed hidden axis.

    x_ref  : (tm, D)   activation tile (resident across the H axis)
    wg_ref : (D, th)   gate weight slice   (pre-transposed in the wrapper)
    wh_ref : (D, th)   hidden weight slice (pre-transposed)
    wo_ref : (th, D)   output weight slice (pre-transposed)
    o_ref  : (tm, D)   output tile, resident across the H axis
    scratch: optional (tm, D) f32 accumulator (only when o_ref is not f32)
    """
    acc_ref = scratch[0] if scratch else o_ref   # f32 output -> accumulate in place
    k = pl.program_id(1)

    @pl.when(k == 0)
    def _():
        acc_ref[...] = jnp.zeros_like(acc_ref)

    x = x_ref[...]
    # Gate / hidden projections for this hidden slice: (tm, th), f32 accum.
    g = jnp.dot(x, wg_ref[...], preferred_element_type=jnp.float32)
    h = jnp.dot(x, wh_ref[...], preferred_element_type=jnp.float32)
    act = (g * jax.nn.sigmoid(g)) * h            # silu(gate) * hidden, in f32

    # Partial output projection: (tm, th) @ (th, D) -> (tm, D); accumulate.
    acc_ref[...] += jnp.dot(act.astype(x.dtype), wo_ref[...],
                            preferred_element_type=jnp.float32)

    if scratch:  # separate f32 accumulator -> cast/copy once on the last step
        @pl.when(k == pl.num_programs(1) - 1)
        def _():
            o_ref[...] = acc_ref[...].astype(o_ref.dtype)


def _device_vmem_bytes():
    try:
        return int(pltpu.get_tpu_info().vmem_capacity_bytes)
    except Exception:
        return 64 << 20   # conservative fallback (v7x per-TensorCore VMEM)


def _vmem_footprint(tm, th, D, csz, osz, out_is_f32):
    b = 2 * tm * D * csz              # x tile, double-buffered
    b += 2 * 3 * th * D * csz         # Wg/Wh/Wo slices, double-buffered
    b += 2 * tm * D * osz             # output tile, double-buffered
    if not out_is_f32:
        b += tm * D * 4               # separate f32 accumulator scratch
    b += 3 * tm * th * 4              # g / h / act f32 intermediates
    return b


def _select_tiles(M, H, D, csz, osz, out_is_f32, vmem_cap, sub):
    # Generation-dependent targets, inferred from VMEM capacity.
    if vmem_cap >= (100 << 20):       # v5e / v6e: 128 MiB VMEM
        tm_tgt, th_tgt = 768, 512
    else:                             # v7x: 64 MiB per TensorCore
        tm_tgt, th_tgt = 512, 256

    tm = min(tm_tgt, _round_up(M, sub))
    th = H if H <= th_tgt else th_tgt     # full-dim block when H is small

    budget = int(0.85 * vmem_cap)
    while int(_vmem_footprint(tm, th, D, csz, osz, out_is_f32) * 1.3) > budget:
        if th > 256 and th != H:          # shrink the streamed-H slice first
            th //= 2
        elif tm > 4 * sub:
            tm = _round_up(max(4 * sub, tm // 2), sub)
        else:
            break
    return tm, th


def swiglu(x, wg, wh, wo, *, compute_dtype=jnp.bfloat16, tm=None, th=None):
    """x: [batch, seq, d_model]; wg/wh: [d_hidden, d_model]; wo: [d_model, d_hidden]
    (PyTorch Linear weight layout: [out_features, in_features])."""
    B, S, D = x.shape
    H, D2 = wg.shape
    assert D2 == D and wh.shape == (H, D) and wo.shape == (D, H)

    out_dtype = x.dtype
    out_is_f32 = jnp.dtype(out_dtype) == jnp.dtype(jnp.float32)
    if compute_dtype is not None and jnp.dtype(compute_dtype) != jnp.dtype(x.dtype):
        x = x.astype(compute_dtype)
        wg = wg.astype(compute_dtype)
        wh = wh.astype(compute_dtype)
        wo = wo.astype(compute_dtype)
    csz = jnp.dtype(x.dtype).itemsize
    osz = jnp.dtype(out_dtype).itemsize
    sub = {1: 32, 2: 16, 4: 8}.get(csz, 8)    # sublane multiple for compute dtype

    # One-time layout change so every in-kernel matmul contracts on the RHS
    # leading (sublane) dim -- no per-step transposes/relayouts inside the loop.
    wgT = wg.T        # (D, H)
    whT = wh.T        # (D, H)
    woT = wo.T        # (H, D)

    M = B * S
    xf = x.reshape(M, D)

    vmem_cap = _device_vmem_bytes()
    tm_eff, th_eff = _select_tiles(M, H, D, csz, osz, out_is_f32, vmem_cap, sub)
    if tm is not None:
        tm_eff = _round_up(min(tm, _round_up(M, sub)), sub)
    if th is not None:
        th_eff = min(th, H)

    # ---- pad M to a tile boundary (zero rows -> zero outputs, sliced off) --
    M_pad = _round_up(M, tm_eff)
    if M_pad != M:
        xf = jnp.pad(xf, ((0, M_pad - M), (0, 0)))

    # ---- pad H to a tile boundary (silu(0)*0 = 0 -> exact result) ----------
    H_pad = _round_up(H, th_eff)
    if H_pad != H:
        wgT = jnp.pad(wgT, ((0, 0), (0, H_pad - H)))
        whT = jnp.pad(whT, ((0, 0), (0, H_pad - H)))
        woT = jnp.pad(woT, ((0, H_pad - H), (0, 0)))

    grid = (M_pad // tm_eff, H_pad // th_eff)
    # NOTE: on v7x the auto-picked tm keeps grid[0] >= 2 whenever M > tm_eff,
    # so the "parallel" token axis can feed both TensorCores.

    footprint = _vmem_footprint(tm_eff, th_eff, D, csz, osz, out_is_f32)
    vmem_limit = int(min(max(int(footprint * 1.3), 4 << 20),
                         int(0.9 * vmem_cap)))

    scratch_shapes = [] if out_is_f32 else [pltpu.VMEM((tm_eff, D), jnp.float32)]

    out_flat = pl.pallas_call(
        _swiglu_kernel,
        out_shape=jax.ShapeDtypeStruct((M_pad, D), out_dtype),
        grid_spec=pltpu.PrefetchScalarGridSpec(
            num_scalar_prefetch=0,
            grid=grid,
            in_specs=[
                pl.BlockSpec((tm_eff, D), lambda i, k: (i, 0)),    # x tile
                pl.BlockSpec((D, th_eff), lambda i, k: (0, k)),    # Wg^T slice
                pl.BlockSpec((D, th_eff), lambda i, k: (0, k)),    # Wh^T slice
                pl.BlockSpec((th_eff, D), lambda i, k: (k, 0)),    # Wo^T slice
            ],
            out_specs=pl.BlockSpec((tm_eff, D), lambda i, k: (i, 0)),
            scratch_shapes=scratch_shapes,
        ),
        compiler_params=pltpu.CompilerParams(
            dimension_semantics=("parallel", "arbitrary"),
            vmem_limit_bytes=vmem_limit),
    )(xf, wgT, whT, woT)

    return out_flat[:M].reshape(B, S, D)


def swiglu_ref(x, wg, wh, wo):
    g = x @ wg.T
    h = x @ wh.T
    return (jax.nn.silu(g) * h) @ wo.T


if __name__ == "__main__":
    key = jax.random.PRNGKey(0)

    def make_case(batch, seq, d_model, d_hidden, k):
        kx, kg, kh, ko = jax.random.split(k, 4)
        x = jax.random.normal(kx, (batch, seq, d_model), jnp.float32)
        wg = jax.random.normal(kg, (d_hidden, d_model), jnp.float32) / jnp.sqrt(d_model)
        wh = jax.random.normal(kh, (d_hidden, d_model), jnp.float32) / jnp.sqrt(d_model)
        wo = jax.random.normal(ko, (d_model, d_hidden), jnp.float32) / jnp.sqrt(d_hidden)
        return x, wg, wh, wo

    def bf16ize(*arrs):
        return tuple(a.astype(jnp.bfloat16).astype(jnp.float32) for a in arrs)

    k1, k2 = jax.random.split(key)

    # Case 1: module defaults (d_hidden = 4 * d_model).  f32 compute path ->
    # strict numerical check against the reference.
    x, wg, wh, wo = make_case(2, 8, 32, 128, k1)
    out = jax.block_until_ready(swiglu(x, wg, wh, wo, compute_dtype=jnp.float32))
    assert out.shape == x.shape and out.dtype == x.dtype
    assert jnp.allclose(out, swiglu_ref(x, wg, wh, wo), atol=1e-4, rtol=1e-4)

    # Case 1b: default bf16 compute (f32 in/out, f32 accumulation).  Compare
    # against the reference evaluated on bf16-rounded inputs.
    out = jax.block_until_ready(swiglu(x, wg, wh, wo))
    ref = swiglu_ref(*bf16ize(x, wg, wh, wo))
    assert jnp.allclose(out, ref, atol=3e-2, rtol=3e-2)

    # Case 2: exercises M padding and streamed/padded H (f32 strict check).
    x, wg, wh, wo = make_case(2, 70, 32, 640, k2)
    out = jax.block_until_ready(swiglu(x, wg, wh, wo, compute_dtype=jnp.float32))
    assert out.shape == x.shape
    assert jnp.allclose(out, swiglu_ref(x, wg, wh, wo), atol=1e-4, rtol=1e-4)

    # Case 2b: bf16 in/out -> exercises the separate f32 accumulator scratch.
    xb, wgb, whb, wob = (a.astype(jnp.bfloat16) for a in (x, wg, wh, wo))
    outb = jax.block_until_ready(swiglu(xb, wgb, whb, wob))
    assert outb.dtype == jnp.bfloat16 and outb.shape == x.shape
    ref = swiglu_ref(*bf16ize(x, wg, wh, wo))
    assert jnp.allclose(outb.astype(jnp.float32), ref, atol=5e-2, rtol=5e-2)

    print("KERNEL_OK")
</pallas_src>

<mosaic_0001>
module attributes {stable_mosaic.version = 11 : i64} {
  func.func @_swiglu_kernel(%arg0: i32, %arg1: i32, %arg2: memref<16x32xf32, #tpu.memory_space<vmem>>, %arg3: memref<32x128xf32, #tpu.memory_space<vmem>>, %arg4: memref<32x128xf32, #tpu.memory_space<vmem>>, %arg5: memref<128x32xf32, #tpu.memory_space<vmem>>, %arg6: memref<16x32xf32, #tpu.memory_space<vmem>>) attributes {dimension_semantics = [#tpu.dimension_semantics<parallel>, #tpu.dimension_semantics<arbitrary>], iteration_bounds = array<i64: 1, 1>, scalar_prefetch = 0 : i64, scratch_operands = 0 : i64, tpu.core_type = #tpu.core_type<tc>, window_params = [{transform_indices = @transform_0, window_bounds = array<i64: 16, 32>}, {transform_indices = @transform_1, window_bounds = array<i64: 32, 128>}, {transform_indices = @transform_2, window_bounds = array<i64: 32, 128>}, {transform_indices = @transform_3, window_bounds = array<i64: 128, 32>}, {transform_indices = @transform_4, window_bounds = array<i64: 16, 32>}]} {
    %c0_i32 = arith.constant 0 : i32
    %0 = arith.cmpi eq, %arg1, %c0_i32 : i32
    %1 = arith.extui %0 : i1 to i32
    %c0_i32_0 = arith.constant 0 : i32
    %2 = arith.cmpi ne, %1, %c0_i32_0 : i32
    scf.if %2 {
      %cst_15 = arith.constant 0.000000e+00 : f32
      %20 = vector.broadcast %cst_15 : f32 to vector<16x32xf32>
      %c0_16 = arith.constant 0 : index
      %c0_17 = arith.constant 0 : index
      %21 = vector.load %arg6[%c0_16, %c0_17] : memref<16x32xf32, #tpu.memory_space<vmem>>, vector<16x32xf32>
      tpu.vector_store %arg6[%c0_16, %c0_17], %20 {strides = array<i32>} : memref<16x32xf32, #tpu.memory_space<vmem>>, vector<16x32xf32>,
    } else {
    }
    %c0 = arith.constant 0 : index
    %c0_1 = arith.constant 0 : index
    %3 = vector.load %arg2[%c0, %c0_1] : memref<16x32xf32, #tpu.memory_space<vmem>>, vector<16x32xf32>
    %c0_2 = arith.constant 0 : index
    %c0_3 = arith.constant 0 : index
    %4 = vector.load %arg3[%c0_2, %c0_3] : memref<32x128xf32, #tpu.memory_space<vmem>>, vector<32x128xf32>
    %cst = arith.constant dense<0.000000e+00> : vector<16x128xf32>
    %5 = tpu.matmul %3, %4, %cst {dimension_numbers = #tpu.dot_dimension_numbers<[1], [0], [0], [1], [0, 0, 1, 1], [], []>} : vector<16x32xf32>, vector<32x128xf32>, vector<16x128xf32> -> vector<16x128xf32>
    %c0_4 = arith.constant 0 : index
    %c0_5 = arith.constant 0 : index
    %6 = vector.load %arg4[%c0_4, %c0_5] : memref<32x128xf32, #tpu.memory_space<vmem>>, vector<32x128xf32>
    %cst_6 = arith.constant dense<0.000000e+00> : vector<16x128xf32>
    %7 = tpu.matmul %3, %6, %cst_6 {dimension_numbers = #tpu.dot_dimension_numbers<[1], [0], [0], [1], [0, 0, 1, 1], [], []>} : vector<16x32xf32>, vector<32x128xf32>, vector<16x128xf32> -> vector<16x128xf32>
    %8 = arith.negf %5 : vector<16x128xf32>
    %9 = math.exp %8 : vector<16x128xf32>
    %cst_7 = arith.constant 1.000000e+00 : f32
    %10 = vector.broadcast %cst_7 : f32 to vector<16x128xf32>
    %11 = arith.addf %10, %9 : vector<16x128xf32>
    %12 = arith.divf %10, %11 : vector<16x128xf32>
    %13 = arith.mulf %5, %12 : vector<16x128xf32>
    %14 = arith.mulf %13, %7 : vector<16x128xf32>
    %c0_8 = arith.constant 0 : index
    %c0_9 = arith.constant 0 : index
    %15 = vector.load %arg6[%c0_8, %c0_9] : memref<16x32xf32, #tpu.memory_space<vmem>>, vector<16x32xf32>
    %c0_10 = arith.constant 0 : index
    %c0_11 = arith.constant 0 : index
    %16 = vector.load %arg5[%c0_10, %c0_11] : memref<128x32xf32, #tpu.memory_space<vmem>>, vector<128x32xf32>
    %cst_12 = arith.constant dense<0.000000e+00> : vector<16x32xf32>
    %17 = tpu.matmul %14, %16, %cst_12 {dimension_numbers = #tpu.dot_dimension_numbers<[1], [0], [0], [1], [0, 0, 1, 1], [], []>} : vector<16x128xf32>, vector<128x32xf32>, vector<16x32xf32> -> vector<16x32xf32>
    %18 = arith.addf %15, %17 : vector<16x32xf32>
    %c0_13 = arith.constant 0 : index
    %c0_14 = arith.constant 0 : index
    %19 = vector.load %arg6[%c0_13, %c0_14] : memref<16x32xf32, #tpu.memory_space<vmem>>, vector<16x32xf32>
    tpu.vector_store %arg6[%c0_13, %c0_14], %18 {strides = array<i32>} : memref<16x32xf32, #tpu.memory_space<vmem>>, vector<16x32xf32>,
    return
  }
  func.func @transform_0(%arg0: i32, %arg1: i32) -> (i32, i32) {
    %c0_i32 = arith.constant 0 : i32
    %c0_i32_0 = arith.constant 0 : i32
    return %arg0, %c0_i32 : i32, i32
  }
  func.func @transform_1(%arg0: i32, %arg1: i32) -> (i32, i32) {
    %c0_i32 = arith.constant 0 : i32
    %c0_i32_0 = arith.constant 0 : i32
    return %c0_i32, %arg1 : i32, i32
  }
  func.func @transform_2(%arg0: i32, %arg1: i32) -> (i32, i32) {
    %c0_i32 = arith.constant 0 : i32
    %c0_i32_0 = arith.constant 0 : i32
    return %c0_i32, %arg1 : i32, i32
  }
  func.func @transform_3(%arg0: i32, %arg1: i32) -> (i32, i32) {
    %c0_i32 = arith.constant 0 : i32
    %c0_i32_0 = arith.constant 0 : i32
    return %arg1, %c0_i32 : i32, i32
  }
  func.func @transform_4(%arg0: i32, %arg1: i32) -> (i32, i32) {
    %c0_i32 = arith.constant 0 : i32
    %c0_i32_0 = arith.constant 0 : i32
    return %arg0, %c0_i32 : i32, i32
  }
}

</mosaic_0001>

<llo_original>
// kernel: tpu_custom_call.1
$region0: #{tpu_custom_call.1}
  #allocation0 [shape = 'u32[]', space=smem, size = 0x4, offset = 0x4, fixed_abs, tag = 'smem constant byte address 0x4 - core index']
  #allocation1 [shape = 'u32[144,128]{1,0:T(1,128)}', space=vmem, size = 0x12000, scoped, tag = 'internal scratch']
  %s0 = inlined_call_operand.vmem [shape: f32[16,32], index: 0, kind: input, shape index: {}]
  %s1 = inlined_call_operand.vmem [shape: f32[32,128], index: 1, kind: input, shape index: {}]
  %s2 = inlined_call_operand.vmem [shape: f32[32,128], index: 2, kind: input, shape index: {}]
  %s3 = inlined_call_operand.vmem [shape: f32[128,32], index: 3, kind: input, shape index: {}]
  %s4 = inlined_call_operand.hbm [shape: f32[16,32], index: 4, kind: output, shape index: {}]
  %s5 = sld [smem:[#allocation0]]
  $region30: #{tpu_custom_call.1} parent=0
    _
  %s7 = ssub.s32 1, %s5
  %s8 = scalar_select 0, %s7, %s5
  $region1: #{tpu_custom_call.1} parent=0
    #allocation2 [shape = 'u8[8192]{0}', space=vmem, size = 0x2000, scoped, tag = 'output window, operand 0, single buffered']
    #allocation3 [shape = 's32[1]{0}', space=sflag, size = 0x4, scoped, tag = 'scoped memory for tpu_custom_call.1']
    %9 = vsyncpa [#allocation3], 0
    // Predicated region
    $region2: #{tpu_custom_call.1} parent=1 // pred_check
      _
    $region3: #{tpu_custom_call.1} parent=1 // pred_check_branch
      %11 = sbr.rel (0) target = $region5
    $region4: #{tpu_custom_call.1} parent=1 // pred_region
      _
    $region5: #{tpu_custom_call.1} parent=1 // pred_fallthru
      _
    // Predicated region
    $region6: #{tpu_custom_call.1} parent=1 // pred_check
      _
    $region7: #{tpu_custom_call.1} parent=1 // pred_check_branch
      %13 = sbr.rel (0) target = $region9
    $region8: #{tpu_custom_call.1} parent=1 // pred_region
      _
    $region9: #{tpu_custom_call.1} parent=1 // pred_fallthru
      _
    // Predicated region
    $region10: #{tpu_custom_call.1} parent=1 // pred_check
      _
    $region11: #{tpu_custom_call.1} parent=1 // pred_check_branch
      %15 = sbr.rel (0) target = $region13
    $region12: #{tpu_custom_call.1} parent=1 // pred_region
      _
    $region13: #{tpu_custom_call.1} parent=1 // pred_fallthru
      _
    // Predicated region
    $region14: #{tpu_custom_call.1} parent=1 // pred_check
      _
    $region15: #{tpu_custom_call.1} parent=1 // pred_check_branch
      %17 = sbr.rel (0) target = $region17
    $region16: #{tpu_custom_call.1} parent=1 // pred_region
      _
    $region17: #{tpu_custom_call.1} parent=1 // pred_fallthru
      _
    %p18 = scmp.eq.s32.totalorder 0, 0
    // Predicated region
    $region18: #{tpu_custom_call.1} parent=1 // pred_check
      %p19 = pneg %p18
    $region19: #{tpu_custom_call.1} parent=1 // pred_check_branch
      %21 = sbr.rel (%p19) target = $region21
    $region20: #{tpu_custom_call.1} parent=1 // pred_region
      %vm22 = vcmask 261120
      %23 = vst.msk [vmem:[#allocation2] sm:$0xff] %vm22, 0.0
      %24 = vst.msk [vmem:[#allocation2 + $0x8] sm:$0xff] %vm22, 0.0
    $region21: #{tpu_custom_call.1} parent=1 // pred_fallthru
      _
    %v25 = vld [vmem:[%s0] sm:$0xff]
    %v26 = vld [vmem:[%s0 + $0x8] sm:$0xff]
    %v27 = vld [vmem:[%s1] sm:$0xff]
    %v28 = vld [vmem:[%s1 + $0x8] sm:$0xff]
    %v29 = vld [vmem:[%s1 + $0x10] sm:$0xff]
    %v30 = vld [vmem:[%s1 + $0x18] sm:$0xff]
    %vm31 = vcmask 261120
    %v33 = vsel %vm31, %v25, 0
    %v36 = vsel %vm31, %v26, 0
    %38 = vmatprep.subr.mxu0 0.0
    %39 = vmatpush1.msra.mxu0 %v27
    %40 = vmatprep.subr.mxu0 0.0
    %41 = vmatpush1.msra.mxu0 %v28
    %42 = vmatprep.subr.mxu0 0.0
    %43 = vmatpush1.msra.mxu0 %v29
    %44 = vmatprep.subr.mxu0 0.0
    %45 = vmatpush1.msra.mxu0 %v30
    %46 = vmatprep.subr.mxu0 0.0
    %47 = vmatpush1.msra.mxu0 0.0
    %48 = vmatprep.subr.mxu0 0.0
    %49 = vmatpush1.msra.mxu0 0.0
    %50 = vmatprep.subr.mxu0 0.0
    %51 = vmatpush1.msra.mxu0 0.0
    %52 = vmatprep.subr.mxu0 0.0
    %53 = vmatpush1.msra.mxu0 0.0
    %54 = vmatprep.subr.mxu0 0.0
    %55 = vmatpush1.msra.mxu0 0.0
    %56 = vmatprep.subr.mxu0 0.0
    %57 = vmatpush1.msra.mxu0 0.0
    %58 = vmatprep.subr.mxu0 0.0
    %59 = vmatpush1.msra.mxu0 0.0
    %60 = vmatprep.subr.mxu0 0.0
    %61 = vmatpush1.msra.mxu0 0.0
    %62 = vmatprep.subr.mxu0 0.0
    %63 = vmatpush1.msra.mxu0 0.0
    %64 = vmatprep.subr.mxu0 0.0
    %65 = vmatpush1.msra.mxu0 0.0
    %66 = vmatprep.subr.mxu0 0.0
    %67 = vmatpush1.msra.mxu0 0.0
    %68 = vmatprep.subr.mxu0 0.0
    %69 = vmatpush1.msra.mxu0 0.0
    %70 = vmatprep.subr.mxu0 0.0
    %71 = vmatpush1.msra.mxu0 0.0
    %72 = vmatprep.subr.mxu0 0.0
    %73 = vmatpush1.msra.mxu0 0.0
    %74 = vmatprep.subr.mxu0 0.0
    %75 = vmatpush1.msra.mxu0 0.0
    %76 = vmatprep.subr.mxu0 0.0
    %77 = vmatpush1.msra.mxu0 0.0
    %78 = vmatprep.subr.mxu0 0.0
    %79 = vmatpush1.msra.mxu0 0.0
    %80 = vmatprep.subr.mxu0 0.0
    %81 = vmatpush1.msra.mxu0 0.0
    %82 = vmatprep.subr.mxu0 0.0
    %83 = vmatpush1.msra.mxu0 0.0
    %84 = vmatprep.subr.mxu0 0.0
    %85 = vmatpush1.msra.mxu0 0.0
    %86 = vmatprep.subr.mxu0 0.0
    %87 = vmatpush1.msra.mxu0 0.0
    %88 = vmatprep.subr.mxu0 0.0
    %89 = vmatpush1.msra.mxu0 0.0
    %90 = vmatprep.subr.mxu0 0.0
    %91 = vmatpush1.msra.mxu0 0.0
    %92 = vmatprep.subr.mxu0 0.0
    %93 = vmatpush1.msra.mxu0 0.0
    %94 = vmatprep.subr.mxu0 0.0
    %95 = vmatpush1.msra.mxu0 0.0
    %96 = vmatprep.subr.mxu0 0.0
    %97 = vmatpush1.msra.mxu0 0.0
    %98 = vmatprep.subr.mxu0 0.0
    %99 = vmatpush1.msra.mxu0 0.0
    %100 = vmatprep.subr.mxu0 0.0
    %101 = vmatpush1.msra.mxu0 0.0
    %102 = vmatprep.mubr.f32.mxu0 0.0
    %103 = vmatmul.mubr.f32.gmra.mrb[0].mxu0 %v33
    %v104 = vpop.f32.mrb[0].mxu0
    %v105 = vadd.f32 0.0, %v104
    %v106 = vpop.f32.mrb[0].mxu0
    %107 = vmatprep.mubr.f32.mxu0 0.0
    %108 = vmatmul.mubr.f32.gmra.mrb[0].mxu0 %v36
    %v109 = vpop.f32.mrb[0].mxu0
    %v110 = vadd.f32 0.0, %v109
    %v111 = vpop.f32.mrb[0].mxu0
    %112 = vdwg.mxu0
    %v113 = vld [vmem:[%s2] sm:$0xff]
    %v114 = vld [vmem:[%s2 + $0x8] sm:$0xff]
    %v115 = vld [vmem:[%s2 + $0x10] sm:$0xff]
    %v116 = vld [vmem:[%s2 + $0x18] sm:$0xff]
    %117 = vmatprep.subr.mxu0 0.0
    %118 = vmatpush1.msra.mxu0 %v113
    %119 = vmatprep.subr.mxu0 0.0
    %120 = vmatpush1.msra.mxu0 %v114
    %121 = vmatprep.subr.mxu0 0.0
    %122 = vmatpush1.msra.mxu0 %v115
    %123 = vmatprep.subr.mxu0 0.0
    %124 = vmatpush1.msra.mxu0 %v116
    %125 = vmatprep.subr.mxu0 0.0
    %126 = vmatpush1.msra.mxu0 0.0
    %127 = vmatprep.subr.mxu0 0.0
    %128 = vmatpush1.msra.mxu0 0.0
    %129 = vmatprep.subr.mxu0 0.0
    %130 = vmatpush1.msra.mxu0 0.0
    %131 = vmatprep.subr.mxu0 0.0
    %132 = vmatpush1.msra.mxu0 0.0
    %133 = vmatprep.subr.mxu0 0.0
    %134 = vmatpush1.msra.mxu0 0.0
    %135 = vmatprep.subr.mxu0 0.0
    %136 = vmatpush1.msra.mxu0 0.0
    %137 = vmatprep.subr.mxu0 0.0
    %138 = vmatpush1.msra.mxu0 0.0
    %139 = vmatprep.subr.mxu0 0.0
    %140 = vmatpush1.msra.mxu0 0.0
    %141 = vmatprep.subr.mxu0 0.0
    %142 = vmatpush1.msra.mxu0 0.0
    %143 = vmatprep.subr.mxu0 0.0
    %144 = vmatpush1.msra.mxu0 0.0
    %145 = vmatprep.subr.mxu0 0.0
    %146 = vmatpush1.msra.mxu0 0.0
    %147 = vmatprep.subr.mxu0 0.0
    %148 = vmatpush1.msra.mxu0 0.0
    %149 = vmatprep.subr.mxu0 0.0
    %150 = vmatpush1.msra.mxu0 0.0
    %151 = vmatprep.subr.mxu0 0.0
    %152 = vmatpush1.msra.mxu0 0.0
    %153 = vmatprep.subr.mxu0 0.0
    %154 = vmatpush1.msra.mxu0 0.0
    %155 = vmatprep.subr.mxu0 0.0
    %156 = vmatpush1.msra.mxu0 0.0
    %157 = vmatprep.subr.mxu0 0.0
    %158 = vmatpush1.msra.mxu0 0.0
    %159 = vmatprep.subr.mxu0 0.0
    %160 = vmatpush1.msra.mxu0 0.0
    %161 = vmatprep.subr.mxu0 0.0
    %162 = vmatpush1.msra.mxu0 0.0
    %163 = vmatprep.subr.mxu0 0.0
    %164 = vmatpush1.msra.mxu0 0.0
    %165 = vmatprep.subr.mxu0 0.0
    %166 = vmatpush1.msra.mxu0 0.0
    %167 = vmatprep.subr.mxu0 0.0
    %168 = vmatpush1.msra.mxu0 0.0
    %169 = vmatprep.subr.mxu0 0.0
    %170 = vmatpush1.msra.mxu0 0.0
    %171 = vmatprep.subr.mxu0 0.0
    %172 = vmatpush1.msra.mxu0 0.0
    %173 = vmatprep.subr.mxu0 0.0
    %174 = vmatpush1.msra.mxu0 0.0
    %175 = vmatprep.subr.mxu0 0.0
    %176 = vmatpush1.msra.mxu0 0.0
    %177 = vmatprep.subr.mxu0 0.0
    %178 = vmatpush1.msra.mxu0 0.0
    %179 = vmatprep.subr.mxu0 0.0
    %180 = vmatpush1.msra.mxu0 0.0
    %181 = vmatprep.mubr.f32.mxu0 0.0
    %182 = vmatmul.mubr.f32.gmra.mrb[0].mxu0 %v33
    %v183 = vpop.f32.mrb[0].mxu0
    %v184 = vadd.f32 0.0, %v183
    %v185 = vpop.f32.mrb[0].mxu0
    %186 = vmatprep.mubr.f32.mxu0 0.0
    %187 = vmatmul.mubr.f32.gmra.mrb[0].mxu0 %v36
    %v188 = vpop.f32.mrb[0].mxu0
    %v189 = vadd.f32 0.0, %v188
    %v190 = vpop.f32.mrb[0].mxu0
    %191 = vdwg.mxu0
    %v192 = vxor.u32 %v105, 2147483648
    %v193 = vxor.u32 %v110, 2147483648
    %v194 = vmul.f32 %v192, 1.442695
    %v195 = vpow.pop %v194
    %v196 = vmul.f32 %v193, 1.442695
    %v197 = vpow.pop %v196
    %v198 = vadd.f32 %v195, 1.0
    %v199 = vadd.f32 %v197, 1.0
    %v200 = vrcp.pop %v198
    %v201 = vmul.f32 1.0, %v200
    %v202 = vrcp.pop %v199
    %v203 = vmul.f32 1.0, %v202
    %v204 = vmul.f32 %v105, %v201
    %v205 = vmul.f32 %v110, %v203
    %v206 = vmul.f32 %v204, %v184
    %v207 = vmul.f32 %v205, %v189
    %v208 = vld [vmem:[#allocation2] sm:$0xff]
    %v209 = vld [vmem:[#allocation2 + $0x8] sm:$0xff]
    %v210 = vld [vmem:[%s3] sm:$0xff]
    %v211 = vld [vmem:[%s3 + $0x8] sm:$0xff]
    %v212 = vld [vmem:[%s3 + $0x10] sm:$0xff]
    %v213 = vld [vmem:[%s3 + $0x18] sm:$0xff]
    %v214 = vld [vmem:[%s3 + $0x20] sm:$0xff]
    %v215 = vld [vmem:[%s3 + $0x28] sm:$0xff]
    %v216 = vld [vmem:[%s3 + $0x30] sm:$0xff]
    %v217 = vld [vmem:[%s3 + $0x38] sm:$0xff]
    %v218 = vld [vmem:[%s3 + $0x40] sm:$0xff]
    %v219 = vld [vmem:[%s3 + $0x48] sm:$0xff]
    %v220 = vld [vmem:[%s3 + $0x50] sm:$0xff]
    %v221 = vld [vmem:[%s3 + $0x58] sm:$0xff]
    %v222 = vld [vmem:[%s3 + $0x60] sm:$0xff]
    %v223 = vld [vmem:[%s3 + $0x68] sm:$0xff]
    %v224 = vld [vmem:[%s3 + $0x70] sm:$0xff]
    %v225 = vld [vmem:[%s3 + $0x78] sm:$0xff]
    %226 = vmatprep.subr.mxu0 0.0
    %227 = vmatpush1.msra.mxu0 %v210
    %228 = vmatprep.subr.mxu0 0.0
    %229 = vmatpush1.msra.mxu0 %v211
    %230 = vmatprep.subr.mxu0 0.0
    %231 = vmatpush1.msra.mxu0 %v212
    %232 = vmatprep.subr.mxu0 0.0
    %233 = vmatpush1.msra.mxu0 %v213
    %234 = vmatprep.subr.mxu0 0.0
    %235 = vmatpush1.msra.mxu0 %v214
    %236 = vmatprep.subr.mxu0 0.0
    %237 = vmatpush1.msra.mxu0 %v215
    %238 = vmatprep.subr.mxu0 0.0
    %239 = vmatpush1.msra.mxu0 %v216
    %240 = vmatprep.subr.mxu0 0.0
    %241 = vmatpush1.msra.mxu0 %v217
    %242 = vmatprep.subr.mxu0 0.0
    %243 = vmatpush1.msra.mxu0 %v218
    %244 = vmatprep.subr.mxu0 0.0
    %245 = vmatpush1.msra.mxu0 %v219
    %246 = vmatprep.subr.mxu0 0.0
    %247 = vmatpush1.msra.mxu0 %v220
    %248 = vmatprep.subr.mxu0 0.0
    %249 = vmatpush1.msra.mxu0 %v221
    %250 = vmatprep.subr.mxu0 0.0
    %251 = vmatpush1.msra.mxu0 %v222
    %252 = vmatprep.subr.mxu0 0.0
    %253 = vmatpush1.msra.mxu0 %v223
    %254 = vmatprep.subr.mxu0 0.0
    %255 = vmatpush1.msra.mxu0 %v224
    %256 = vmatprep.subr.mxu0 0.0
    %257 = vmatpush1.msra.mxu0 %v225
    %258 = vmatprep.subr.mxu0 0.0
    %259 = vmatpush1.msra.mxu0 0.0
    %260 = vmatprep.subr.mxu0 0.0
    %261 = vmatpush1.msra.mxu0 0.0
    %262 = vmatprep.subr.mxu0 0.0
    %263 = vmatpush1.msra.mxu0 0.0
    %264 = vmatprep.subr.mxu0 0.0
    %265 = vmatpush1.msra.mxu0 0.0
    %266 = vmatprep.subr.mxu0 0.0
    %267 = vmatpush1.msra.mxu0 0.0
    %268 = vmatprep.subr.mxu0 0.0
    %269 = vmatpush1.msra.mxu0 0.0
    %270 = vmatprep.subr.mxu0 0.0
    %271 = vmatpush1.msra.mxu0 0.0
    %272 = vmatprep.subr.mxu0 0.0
    %273 = vmatpush1.msra.mxu0 0.0
    %274 = vmatprep.subr.mxu0 0.0
    %275 = vmatpush1.msra.mxu0 0.0
    %276 = vmatprep.subr.mxu0 0.0
    %277 = vmatpush1.msra.mxu0 0.0
    %278 = vmatprep.subr.mxu0 0.0
    %279 = vmatpush1.msra.mxu0 0.0
    %280 = vmatprep.subr.mxu0 0.0
    %281 = vmatpush1.msra.mxu0 0.0
    %282 = vmatprep.subr.mxu0 0.0
    %283 = vmatpush1.msra.mxu0 0.0
    %284 = vmatprep.subr.mxu0 0.0
    %285 = vmatpush1.msra.mxu0 0.0
    %286 = vmatprep.subr.mxu0 0.0
    %287 = vmatpush1.msra.mxu0 0.0
    %288 = vmatprep.subr.mxu0 0.0
    %289 = vmatpush1.msra.mxu0 0.0
    %290 = vmatprep.mubr.f32.mxu0 0.0
    %291 = vmatmul.mubr.f32.gmra.mrb[0].mxu0 %v206
    %v292 = vpop.f32.mrb[0].mxu0
    %v293 = vadd.f32 0.0, %v292
    %v294 = vpop.f32.mrb[0].mxu0
    %295 = vmatprep.mubr.f32.mxu0 0.0
    %296 = vmatmul.mubr.f32.gmra.mrb[0].mxu0 %v207
    %v297 = vpop.f32.mrb[0].mxu0
    %v298 = vadd.f32 0.0, %v297
    %v299 = vpop.f32.mrb[0].mxu0
    %300 = vdwg.mxu0
    %v301 = vadd.f32 %v208, %v293
    %v302 = vadd.f32 %v209, %v298
    %303 = vst.msk [vmem:[#allocation2] sm:$0xff] %vm31, %v301
    %304 = vst.msk [vmem:[#allocation2 + $0x8] sm:$0xff] %vm31, %v302
    // Predicated region
    $region22: #{tpu_custom_call.1} parent=1 // pred_check
      _
    $region23: #{tpu_custom_call.1} parent=1 // pred_check_branch
      %306 = sbr.rel (0) target = $region25
    $region24: #{tpu_custom_call.1} parent=1 // pred_region
      %s308 = ssub.s32 256, 256
      %309 = vsyncadd [#allocation3], %s308
      %s310 = sshll.u32 [#allocation2], 4
      %s311 = int_to_ptr.vmem [resolvable:$true] %s310
      %316 = dma.vmem_to_hbm [thread:$0]  %s311, 256, %s4, [#allocation3], 128, 128, 8
    $region25: #{tpu_custom_call.1} parent=1 // pred_fallthru
      _
    // Predicated region
    $region26: #{tpu_custom_call.1} parent=1 // pred_check
      _
    $region27: #{tpu_custom_call.1} parent=1 // pred_check_branch
      %318 = sbr.rel (0) target = $region29
    $region28: #{tpu_custom_call.1} parent=1 // pred_region
      %319 = dma.done [#allocation3], 256
    $region29: #{tpu_custom_call.1} parent=1 // pred_fallthru
      _
    %320 = vsyncpa [#allocation3], 1

</llo_original>
